<compile_context>
chip_gen: v7x
topology: tpu7x:2x2x1
jax: 0.10.0
libtpu: 0.0.40
codegen_flags: <defaults>
</compile_context>

<pallas_src>
import jax
import jax.numpy as jnp
from jax.experimental import pallas as pl
from jax.experimental.pallas import tpu as pltpu


def _ceil_to(a, m):
    return -(-a // m) * m


def _vmem_footprint(cin, tile_co, tile_hw):
    """Bytes of double-buffered f32 VMEM blocks, with (8,128) layout padding."""
    lane = _ceil_to(tile_hw, 128)
    x_blk = 4 * _ceil_to(cin, 8) * lane * 4           # (4, Cin, tile_hw)
    o_blk = _ceil_to(tile_co, 8) * lane * 4           # (tile_co, tile_hw)
    w_blk = _ceil_to(tile_co, 8) * _ceil_to(cin, 128) * 4   # (tile_co, Cin)
    b_blk = _ceil_to(tile_co, 8) * 128 * 4            # (tile_co, 1) pads to 128 lanes
    return 2 * (x_blk + o_blk + w_blk + b_blk)        # x2: double buffering


def _fit_tiles(cin, cout, hwo, budget):
    """Pick (tile_co, tile_hw) whose double-buffered block set fits `budget`."""
    tile_hw = hwo if hwo <= 1024 else 1024            # full extent is always legal
    if tile_hw < hwo:
        tile_hw = max(128, (tile_hw // 128) * 128)    # tiled -> 128-multiple
    tile_co = cout

    # Phase 1: shrink the pixel tile, but not below 512 lanes (~85% of HBM roofline).
    while _vmem_footprint(cin, tile_co, tile_hw) > budget and tile_hw > 512:
        tile_hw = max(512, ((tile_hw // 2) // 128) * 128)
    # Phase 2: tile Cout instead (keeps lane-dense >=512 pixel tiles).
    while _vmem_footprint(cin, tile_co, tile_hw) > budget and tile_co > 64:
        tile_co = max(64, _ceil_to(tile_co // 2, 8))
    # Phase 3: last resort -- shrink the pixel tile further.
    while _vmem_footprint(cin, tile_co, tile_hw) > budget and tile_hw > 128:
        tile_hw = max(128, ((tile_hw // 2) // 128) * 128)
    return tile_co, tile_hw


def convpool_kernel(x_ref, w_ref, b_ref, o_ref):
    # x_ref: (4, Cin, tile_hw)  -- pixels on lanes (batch dim squeezed by BlockSpec)
    # w_ref: (tile_co, Cin)     -- BN-scale-folded 1x1 conv weight
    # b_ref: (tile_co, 1)       -- folded BN bias (includes conv bias)
    # o_ref: (tile_co, tile_hw)
    w = w_ref[...]
    d0 = jnp.dot(w, x_ref[0], preferred_element_type=jnp.float32)
    d1 = jnp.dot(w, x_ref[1], preferred_element_type=jnp.float32)
    d2 = jnp.dot(w, x_ref[2], preferred_element_type=jnp.float32)
    d3 = jnp.dot(w, x_ref[3], preferred_element_type=jnp.float32)
    # Tree max: shorter MXU-result -> VPU-max dependency chain than a running max.
    z = jnp.maximum(jnp.maximum(d0, d1), jnp.maximum(d2, d3))
    # relu(max_k(W@x_k) + b) == max_k relu(W@x_k + b): apply bias/ReLU once.
    o_ref[...] = jnp.maximum(z + b_ref[...], 0.0).astype(o_ref.dtype)


def convpool_pallas(x_nchw, w, conv_bias, gamma, beta, run_mean, run_var,
                    eps=1e-5, pool=2):
    """x_nchw: (N, Cin, H, W) float32.  Returns (N, Cout, H//pool, W//pool)."""
    N, Cin, H, W = x_nchw.shape
    Cout = w.shape[0]
    assert pool == 2, "kernel specialized for pool=2"
    assert H % pool == 0 and W % pool == 0, "H and W must be divisible by pool"
    Ho, Wo = H // pool, W // pool
    HWo = Ho * Wo

    # --- tile selection: lane-dense pixel tiles, explicit VMEM budget -----------
    # 20 MiB block budget works on all generations because we also set
    # vmem_limit_bytes explicitly below (v5e's 16 MiB default scoped limit is
    # raised; v7x's 64 MiB physical still has ample headroom).
    budget = 20 * 1024 * 1024
    tile_co, tile_hw = _fit_tiles(Cin, Cout, HWo, budget)
    n_hw = pl.cdiv(HWo, tile_hw)
    n_co = pl.cdiv(Cout, tile_co)
    if N * n_hw * n_co < 2 and HWo >= 256:
        # Guarantee >=2 'parallel' grid steps so v7x megacore shards across both
        # TensorCores (single-TC chips just loop; negligible cost).
        tile_hw = _ceil_to(-(-HWo // 2), 128)
        n_hw = pl.cdiv(HWo, tile_hw)
    grid = (N, n_hw, n_co)   # co innermost: x block index constant across co tiles

    # --- glue: NCHW -> (N, 4, Cin, HWo) in one reshape+transpose, NO pad --------
    x_win = x_nchw.reshape(N, Cin, Ho, pool, Wo, pool)
    x_kcp = jnp.transpose(x_win, (0, 3, 5, 1, 2, 4)).reshape(N, pool * pool, Cin, HWo)

    # --- glue: fold conv bias + BN (eval mode) into weight/bias -----------------
    w2d = w.reshape(Cout, Cin)
    bn_scale = gamma / jnp.sqrt(run_var + eps)                     # (Cout,)
    w_folded = w2d * bn_scale[:, None]                             # (Cout, Cin)
    bias = (beta + (conv_bias - run_mean) * bn_scale).reshape(Cout, 1)

    footprint = _vmem_footprint(Cin, tile_co, tile_hw)
    vmem_limit = max(32 * 1024 * 1024, footprint + 4 * 1024 * 1024)

    out = pl.pallas_call(
        convpool_kernel,
        out_shape=jax.ShapeDtypeStruct((N, Cout, HWo), x_nchw.dtype),
        grid_spec=pltpu.PrefetchScalarGridSpec(
            num_scalar_prefetch=0,
            grid=grid,
            in_specs=[
                pl.BlockSpec((None, pool * pool, Cin, tile_hw),
                             lambda n, t, c: (n, 0, 0, t)),
                pl.BlockSpec((tile_co, Cin), lambda n, t, c: (c, 0)),
                pl.BlockSpec((tile_co, 1), lambda n, t, c: (c, 0)),
            ],
            out_specs=pl.BlockSpec((None, tile_co, tile_hw),
                                   lambda n, t, c: (n, c, t)),
        ),
        compiler_params=pltpu.CompilerParams(
            dimension_semantics=("parallel", "parallel", "parallel"),
            vmem_limit_bytes=vmem_limit),
    )(x_kcp, w_folded, bias)

    # --- epilogue: free reshape (no transpose pass) ------------------------------
    return out.reshape(N, Cout, Ho, Wo)


def convpool_reference(x_nchw, w, conv_bias, gamma, beta, run_mean, run_var,
                       eps=1e-5, pool=2):
    """Pure-JAX reference (eval-mode BN)."""
    N, Cin, H, W = x_nchw.shape
    Cout = w.shape[0]
    x = jnp.transpose(x_nchw, (0, 2, 3, 1))                            # NHWC
    y = jnp.einsum("nhwc,oc->nhwo", x, w.reshape(Cout, Cin)) + conv_bias
    y = (y - run_mean) / jnp.sqrt(run_var + eps) * gamma + beta
    y = jnp.maximum(y, 0.0)
    Ho, Wo = H // pool, W // pool
    y = y.reshape(N, Ho, pool, Wo, pool, Cout).max(axis=(2, 4))
    return jnp.transpose(y, (0, 3, 1, 2))                              # NCHW


if __name__ == "__main__":
    key = jax.random.PRNGKey(0)
    N, Cin, H, W = 2, 4, 16, 16
    Cout, pool = 8, 2

    k_x, k_w, k_b, k_g, k_be, k_v = jax.random.split(key, 6)
    x = jax.random.normal(k_x, (N, Cin, H, W), dtype=jnp.float32)
    w = jax.random.normal(k_w, (Cout, Cin, 1, 1), dtype=jnp.float32) * 0.5
    conv_bias = jax.random.normal(k_b, (Cout,), dtype=jnp.float32) * 0.1
    gamma = 1.0 + 0.1 * jax.random.normal(k_g, (Cout,), dtype=jnp.float32)
    beta = 0.1 * jax.random.normal(k_be, (Cout,), dtype=jnp.float32)
    run_mean = jnp.zeros((Cout,), dtype=jnp.float32)
    run_var = jnp.ones((Cout,), dtype=jnp.float32) + 0.05 * jax.nn.softplus(
        jax.random.normal(k_v, (Cout,), dtype=jnp.float32))

    out = convpool_pallas(x, w, conv_bias, gamma, beta, run_mean, run_var, pool=pool)
    out = jax.block_until_ready(out)

    ref = convpool_reference(x, w, conv_bias, gamma, beta, run_mean, run_var, pool=pool)
    assert out.shape == (N, Cout, H // pool, W // pool), out.shape
    assert jnp.allclose(out, ref, atol=1e-5, rtol=1e-5), float(jnp.max(jnp.abs(out - ref)))

    print("KERNEL_OK")
</pallas_src>

<mosaic_0001>
module attributes {stable_mosaic.version = 11 : i64} {
  func.func @convpool_kernel(%arg0: i32, %arg1: i32, %arg2: i32, %arg3: memref<1x4x4x64xf32, #tpu.memory_space<vmem>>, %arg4: memref<8x4xf32, #tpu.memory_space<vmem>>, %arg5: memref<8x1xf32, #tpu.memory_space<vmem>>, %arg6: memref<1x8x64xf32, #tpu.memory_space<vmem>>) attributes {dimension_semantics = [#tpu.dimension_semantics<parallel>, #tpu.dimension_semantics<parallel>, #tpu.dimension_semantics<parallel>], iteration_bounds = array<i64: 2, 1, 1>, scalar_prefetch = 0 : i64, scratch_operands = 0 : i64, tpu.core_type = #tpu.core_type<tc>, window_params = [{transform_indices = @transform_0, window_bounds = array<i64: 1, 4, 4, 64>}, {transform_indices = @transform_1, window_bounds = array<i64: 8, 4>}, {transform_indices = @transform_2, window_bounds = array<i64: 8, 1>}, {transform_indices = @transform_3, window_bounds = array<i64: 1, 8, 64>}]} {
    %c0 = arith.constant 0 : index
    %c0_0 = arith.constant 0 : index
    %0 = vector.load %arg4[%c0, %c0_0] : memref<8x4xf32, #tpu.memory_space<vmem>>, vector<8x4xf32>
    %c0_1 = arith.constant 0 : index
    %c0_2 = arith.constant 0 : index
    %c0_3 = arith.constant 0 : index
    %c0_4 = arith.constant 0 : index
    %1 = vector.load %arg3[%c0_1, %c0_2, %c0_3, %c0_4] : memref<1x4x4x64xf32, #tpu.memory_space<vmem>>, vector<1x1x4x64xf32>
    %2 = vector.shape_cast %1 : vector<1x1x4x64xf32> to vector<4x64xf32>
    %cst = arith.constant dense<0.000000e+00> : vector<8x64xf32>
    %3 = tpu.matmul %0, %2, %cst {dimension_numbers = #tpu.dot_dimension_numbers<[1], [0], [0], [1], [0, 0, 1, 1], [], []>} : vector<8x4xf32>, vector<4x64xf32>, vector<8x64xf32> -> vector<8x64xf32>
    %c0_5 = arith.constant 0 : index
    %c1 = arith.constant 1 : index
    %c0_6 = arith.constant 0 : index
    %c0_7 = arith.constant 0 : index
    %4 = vector.load %arg3[%c0_5, %c1, %c0_6, %c0_7] : memref<1x4x4x64xf32, #tpu.memory_space<vmem>>, vector<1x1x4x64xf32>
    %5 = vector.shape_cast %4 : vector<1x1x4x64xf32> to vector<4x64xf32>
    %cst_8 = arith.constant dense<0.000000e+00> : vector<8x64xf32>
    %6 = tpu.matmul %0, %5, %cst_8 {dimension_numbers = #tpu.dot_dimension_numbers<[1], [0], [0], [1], [0, 0, 1, 1], [], []>} : vector<8x4xf32>, vector<4x64xf32>, vector<8x64xf32> -> vector<8x64xf32>
    %c0_9 = arith.constant 0 : index
    %c2 = arith.constant 2 : index
    %c0_10 = arith.constant 0 : index
    %c0_11 = arith.constant 0 : index
    %7 = vector.load %arg3[%c0_9, %c2, %c0_10, %c0_11] : memref<1x4x4x64xf32, #tpu.memory_space<vmem>>, vector<1x1x4x64xf32>
    %8 = vector.shape_cast %7 : vector<1x1x4x64xf32> to vector<4x64xf32>
    %cst_12 = arith.constant dense<0.000000e+00> : vector<8x64xf32>
    %9 = tpu.matmul %0, %8, %cst_12 {dimension_numbers = #tpu.dot_dimension_numbers<[1], [0], [0], [1], [0, 0, 1, 1], [], []>} : vector<8x4xf32>, vector<4x64xf32>, vector<8x64xf32> -> vector<8x64xf32>
    %c0_13 = arith.constant 0 : index
    %c3 = arith.constant 3 : index
    %c0_14 = arith.constant 0 : index
    %c0_15 = arith.constant 0 : index
    %10 = vector.load %arg3[%c0_13, %c3, %c0_14, %c0_15] : memref<1x4x4x64xf32, #tpu.memory_space<vmem>>, vector<1x1x4x64xf32>
    %11 = vector.shape_cast %10 : vector<1x1x4x64xf32> to vector<4x64xf32>
    %cst_16 = arith.constant dense<0.000000e+00> : vector<8x64xf32>
    %12 = tpu.matmul %0, %11, %cst_16 {dimension_numbers = #tpu.dot_dimension_numbers<[1], [0], [0], [1], [0, 0, 1, 1], [], []>} : vector<8x4xf32>, vector<4x64xf32>, vector<8x64xf32> -> vector<8x64xf32>
    %13 = arith.maximumf %3, %6 : vector<8x64xf32>
    %14 = arith.maximumf %9, %12 : vector<8x64xf32>
    %15 = arith.maximumf %13, %14 : vector<8x64xf32>
    %c0_17 = arith.constant 0 : index
    %c0_18 = arith.constant 0 : index
    %16 = vector.load %arg5[%c0_17, %c0_18] : memref<8x1xf32, #tpu.memory_space<vmem>>, vector<8x1xf32>
    %17 = vector.broadcast %16 : vector<8x1xf32> to vector<8x64xf32>
    %18 = arith.addf %15, %17 : vector<8x64xf32>
    %cst_19 = arith.constant 0.000000e+00 : f32
    %19 = vector.broadcast %cst_19 : f32 to vector<8x64xf32>
    %20 = arith.maximumf %18, %19 : vector<8x64xf32>
    %c0_20 = arith.constant 0 : index
    %c0_21 = arith.constant 0 : index
    %c0_22 = arith.constant 0 : index
    %21 = vector.load %arg6[%c0_20, %c0_21, %c0_22] : memref<1x8x64xf32, #tpu.memory_space<vmem>>, vector<1x8x64xf32>
    %22 = vector.shape_cast %21 : vector<1x8x64xf32> to vector<8x64xf32>
    %23 = vector.shape_cast %20 : vector<8x64xf32> to vector<1x8x64xf32>
    tpu.vector_store %arg6[%c0_20, %c0_21, %c0_22], %23 {strides = array<i32>} : memref<1x8x64xf32, #tpu.memory_space<vmem>>, vector<1x8x64xf32>,
    return
  }
  func.func @transform_0(%arg0: i32, %arg1: i32, %arg2: i32) -> (i32, i32, i32, i32) {
    %c0_i32 = arith.constant 0 : i32
    %c0_i32_0 = arith.constant 0 : i32
    %c0_i32_1 = arith.constant 0 : i32
    return %arg0, %c0_i32, %c0_i32_0, %arg1 : i32, i32, i32, i32
  }
  func.func @transform_1(%arg0: i32, %arg1: i32, %arg2: i32) -> (i32, i32) {
    %c0_i32 = arith.constant 0 : i32
    %c0_i32_0 = arith.constant 0 : i32
    return %arg2, %c0_i32 : i32, i32
  }
  func.func @transform_2(%arg0: i32, %arg1: i32, %arg2: i32) -> (i32, i32) {
    %c0_i32 = arith.constant 0 : i32
    %c0_i32_0 = arith.constant 0 : i32
    return %arg2, %c0_i32 : i32, i32
  }
  func.func @transform_3(%arg0: i32, %arg1: i32, %arg2: i32) -> (i32, i32, i32) {
    %c0_i32 = arith.constant 0 : i32
    return %arg0, %arg2, %arg1 : i32, i32, i32
  }
}

</mosaic_0001>

<llo_original>
// kernel: tpu_custom_call.1
$region0: #{tpu_custom_call.1}
  #allocation0 [shape = 'u32[]', space=smem, size = 0x4, offset = 0x4, fixed_abs, tag = 'smem constant byte address 0x4 - core index']
  #allocation1 [shape = 'u32[144,128]{1,0:T(1,128)}', space=vmem, size = 0x12000, scoped, tag = 'internal scratch']
  %s0 = inlined_call_operand.hbm [shape: f32[2,4,4,64], index: 0, kind: input, shape index: {}]
  %s1 = inlined_call_operand.vmem [shape: f32[8,4], index: 1, kind: input, shape index: {}]
  %s2 = inlined_call_operand.vmem [shape: f32[8,1], index: 2, kind: input, shape index: {}]
  %s3 = inlined_call_operand.hbm [shape: f32[2,8,64], index: 3, kind: output, shape index: {}]
  %s4 = sld [smem:[#allocation0]]
  $region49: #{tpu_custom_call.1} parent=0
    _
  %s6 = ssub.s32 1, %s4
  %s7 = scalar_select 0, %s6, %s4
  $region1: #{tpu_custom_call.1} parent=0
    #allocation2 [shape = 'u8[16384]{0}', space=vmem, size = 0x4000, scoped, tag = 'input window, operand 0']
    #allocation3 [shape = 's32[2]{0}', space=sflag, size = 0x8, scoped, tag = 'scoped memory for tpu_custom_call.1']
    #allocation4 [shape = 's32[2]{0}', space=sflag, size = 0x8, scoped, tag = 'scoped memory for tpu_custom_call.1']
    #allocation5 [shape = 'u8[8192]{0}', space=vmem, size = 0x2000, scoped, tag = 'output window, operand 0']
    %8 = vsyncpa [#allocation3], 0
    %s9 = scalar_lea.sflag [#allocation3], 1
    %10 = vsyncpa %s9, 0
    %11 = vsyncpa [#allocation4], 0
    %s12 = scalar_lea.sflag [#allocation4], 1
    %13 = vsyncpa %s12, 0
    loop: start=0, step=1, limit=4
    $region2: #{tpu_custom_call.1} parent=1 // loop_pre_header
      _
    $region3: #{tpu_custom_call.1} parent=1 // loop_header
      %s15 = sphi 0, %s19
      %p16 = scmp.ge.s32.totalorder %s15, 4
      %s22 = sphi 0, %s41
      %s23 = sphi 0, %s37
      %s24 = sphi 0, %s33
      %s25 = sphi 0, %s22
      %s26 = sphi 0, %s23
      %s27 = sphi 0, %s24
      %s28 = sphi 0, %s25
      %s29 = sphi 0, %s26
      %s30 = sphi 0, %s27
      %s46 = sphi 0, %s48
      %s49 = sphi 0, %s46
      %s50 = sphi 0, %s49
      %s66 = sphi 0, %s50
      %s72 = sphi 0, %s74
      %s75 = sphi 0, %s72
      %s76 = sphi 0, %s75
      %s92 = sphi 0, %s76
      %s98 = sphi 0, %s100
      %s101 = sphi 0, %s98
      %s102 = sphi 0, %s101
      %s118 = sphi 0, %s102
      %s128 = sphi 0, %s130
      %s131 = sphi 0, %s128
      %s132 = sphi 0, %s131
      %s148 = sphi 0, %s132
    $region4: #{tpu_custom_call.1} parent=1 // loop_header_branch
      %18 = sbr.rel (%p16) target = $region8
    $region5: #{tpu_custom_call.1} parent=1 // loop_body
      %s20 = ssub.s32 %s15, 1
      %s21 = ssub.s32 %s15, 2
      %s31 = sadd.s32 1, %s24
      %p32 = scmp.ge.s32.totalorder %s31, 1
      %s33 = scalar_select %p32, 0, %s31
      %s34 = sadd.s32 1, %s23
      %s35 = scalar_select %p32, %s34, %s23
      %p36 = scmp.ge.s32.totalorder %s35, 1
      %s37 = scalar_select %p36, 0, %s35
      %s38 = sadd.s32 1, %s22
      %s39 = scalar_select %p36, %s38, %s22
      %p40 = scmp.ge.s32.totalorder %s39, 2
      %s41 = scalar_select %p40, 0, %s39
      %s42 = ssub.s32 %s22, %s41
      %s43 = ssub.s32 %s23, %s37
      %s44 = sor.u32 %s42, %s43
      %p45 = scmp.eq.s32.totalorder %s44, 0
      %s47 = sadd.s32 %s46, 1
      %s48 = scalar_select %p45, %s46, %s47
      %p51 = pneg %p45
      %p52 = scmp.eq.s32.totalorder %s15, 1
      %p53 = por %p51, %p52
      %p54 = scmp.ne.s32.totalorder %s46, %s49
      %p55 = scmp.eq.s32.totalorder %s15, 0
      %p56 = por %p54, %p55
      %p57 = scmp.ne.s32.totalorder %s46, %s49
      %p58 = scmp.eq.s32.totalorder %s20, 1
      %p59 = por %p57, %p58
      %p60 = scmp.ne.s32.totalorder %s49, %s50
      %p61 = scmp.eq.s32.totalorder %s20, 0
      %p62 = por %p60, %p61
      %p63 = scmp.ne.s32.totalorder %s49, %s50
      %p64 = scmp.eq.s32.totalorder %s21, 1
      %p65 = por %p63, %p64
      %p67 = scmp.ne.s32.totalorder %s50, %s66
      %p68 = scmp.eq.s32.totalorder %s21, 0
      %p69 = por %p67, %p68
      %s70 = ssub.s32 %s24, %s33
      %p71 = scmp.eq.s32.totalorder %s70, 0
      %s73 = sadd.s32 %s72, 1
      %s74 = scalar_select %p71, %s72, %s73
      %p77 = pneg %p71
      %p78 = scmp.eq.s32.totalorder %s15, 1
      %p79 = por %p77, %p78
      %p80 = scmp.ne.s32.totalorder %s72, %s75
      %p81 = scmp.eq.s32.totalorder %s15, 0
      %p82 = por %p80, %p81
      %p83 = scmp.ne.s32.totalorder %s72, %s75
      %p84 = scmp.eq.s32.totalorder %s20, 1
      %p85 = por %p83, %p84
      %p86 = scmp.ne.s32.totalorder %s75, %s76
      %p87 = scmp.eq.s32.totalorder %s20, 0
      %p88 = por %p86, %p87
      %p89 = scmp.ne.s32.totalorder %s75, %s76
      %p90 = scmp.eq.s32.totalorder %s21, 1
      %p91 = por %p89, %p90
      %p93 = scmp.ne.s32.totalorder %s76, %s92
      %p94 = scmp.eq.s32.totalorder %s21, 0
      %p95 = por %p93, %p94
      %s96 = ssub.s32 %s24, %s33
      %p97 = scmp.eq.s32.totalorder %s96, 0
      %s99 = sadd.s32 %s98, 1
      %s100 = scalar_select %p97, %s98, %s99
      %p103 = pneg %p97
      %p104 = scmp.eq.s32.totalorder %s15, 1
      %p105 = por %p103, %p104
      %p106 = scmp.ne.s32.totalorder %s98, %s101
      %p107 = scmp.eq.s32.totalorder %s15, 0
      %p108 = por %p106, %p107
      %p109 = scmp.ne.s32.totalorder %s98, %s101
      %p110 = scmp.eq.s32.totalorder %s20, 1
      %p111 = por %p109, %p110
      %p112 = scmp.ne.s32.totalorder %s101, %s102
      %p113 = scmp.eq.s32.totalorder %s20, 0
      %p114 = por %p112, %p113
      %p115 = scmp.ne.s32.totalorder %s101, %s102
      %p116 = scmp.eq.s32.totalorder %s21, 1
      %p117 = por %p115, %p116
      %p119 = scmp.ne.s32.totalorder %s102, %s118
      %p120 = scmp.eq.s32.totalorder %s21, 0
      %p121 = por %p119, %p120
      %s122 = ssub.s32 %s22, %s41
      %s123 = ssub.s32 %s24, %s33
      %s124 = sor.u32 %s122, %s123
      %s125 = ssub.s32 %s23, %s37
      %s126 = sor.u32 %s124, %s125
      %p127 = scmp.eq.s32.totalorder %s126, 0
      %s129 = sadd.s32 %s128, 1
      %s130 = scalar_select %p127, %s128, %s129
      %p133 = pneg %p127
      %p134 = scmp.eq.s32.totalorder %s15, 1
      %p135 = por %p133, %p134
      %p136 = scmp.ne.s32.totalorder %s128, %s131
      %p137 = scmp.eq.s32.totalorder %s15, 0
      %p138 = por %p136, %p137
      %p139 = scmp.ne.s32.totalorder %s128, %s131
      %p140 = scmp.eq.s32.totalorder %s20, 1
      %p141 = por %p139, %p140
      %p142 = scmp.ne.s32.totalorder %s131, %s132
      %p143 = scmp.eq.s32.totalorder %s20, 0
      %p144 = por %p142, %p143
      %p145 = scmp.ne.s32.totalorder %s131, %s132
      %p146 = scmp.eq.s32.totalorder %s21, 1
      %p147 = por %p145, %p146
      %p149 = scmp.ne.s32.totalorder %s132, %s148
      %p150 = scmp.eq.s32.totalorder %s21, 0
      %p151 = por %p149, %p150
      %p152 = scmp.le.s32.totalorder 1, %s15
      %p153 = scmp.lt.s32.totalorder %s15, 3
      %p154 = pnand %p152, %p153
      %p155 = pneg %p154
      // Predicated region
      $region9: #{tpu_custom_call.1} parent=5 // pred_check
        _
      $region10: #{tpu_custom_call.1} parent=5 // pred_check_branch
        %157 = sbr.rel (%p154) target = $region12
      $region11: #{tpu_custom_call.1} parent=5 // pred_region
        %s158 = ssub.s32 %s15, 1
        // Predicated region
        $region13: #{tpu_custom_call.1} parent=11 // pred_check
          %p159 = pneg %p88
        $region14: #{tpu_custom_call.1} parent=11 // pred_check_branch
          %161 = sbr.rel (%p159) target = $region16
        $region15: #{tpu_custom_call.1} parent=11 // pred_region
          %p162 = scmp.lt.s32.totalorder %s27, 0
          %s163 = scalar_select %p162, %s27, 0
          %s164 = smul.addr %s163, 8
          %s165 = scalar_lea.vmem %s1, %s164
        $region16: #{tpu_custom_call.1} parent=11 // pred_fallthru
          _
        // Predicated region
        $region17: #{tpu_custom_call.1} parent=11 // pred_check
          %p166 = pneg %p114
        $region18: #{tpu_custom_call.1} parent=11 // pred_check_branch
          %168 = sbr.rel (%p166) target = $region20
        $region19: #{tpu_custom_call.1} parent=11 // pred_region
          %p169 = scmp.lt.s32.totalorder %s27, 0
          %s170 = scalar_select %p169, %s27, 0
          %s171 = smul.addr %s170, 8
          %s172 = scalar_lea.vmem %s2, %s171
        $region20: #{tpu_custom_call.1} parent=11 // pred_fallthru
          _
      $region12: #{tpu_custom_call.1} parent=5 // pred_fallthru
        _
      %p173 = scmp.lt.s32.totalorder %s15, 2
      // Predicated region
      $region21: #{tpu_custom_call.1} parent=5 // pred_check
        %p174 = pneg %p173
      $region22: #{tpu_custom_call.1} parent=5 // pred_check_branch
        %176 = sbr.rel (%p174) target = $region24
      $region23: #{tpu_custom_call.1} parent=5 // pred_region
        // Predicated region
        $region25: #{tpu_custom_call.1} parent=23 // pred_check
          %p177 = pneg %p56
        $region26: #{tpu_custom_call.1} parent=23 // pred_check_branch
          %179 = sbr.rel (%p177) target = $region28
        $region27: #{tpu_custom_call.1} parent=23 // pred_region
          %s180 = sand.u32 %s46, 1
          %s181 = scalar_lea.sflag [#allocation3], %s180
          %s182 = sand.u32 %s46, 1
          %s183 = smul.addr %s182, 16
          %s184 = scalar_lea.vmem [#allocation2], %s183
          %s186 = ssub.s32 256, 256
          %187 = vsyncadd %s181, %s186
          %s188 = smul.addr %s22, 4
          %s189 = sadd.s32 %s23, %s188
          %s190 = smul.addr %s189, 64
          %s191 = scalar_lea.hbm %s0, %s190
          %s192 = sshll.u32 %s184, 4
          %s193 = int_to_ptr.vmem [resolvable:$true] %s192
          %198 = dma.hbm_to_vmem [thread:$0]  %s191, 256, %s193, %s181, 64, 64, 4
        $region28: #{tpu_custom_call.1} parent=23 // pred_fallthru
          _
      $region24: #{tpu_custom_call.1} parent=5 // pred_fallthru
        _
      %p199 = scmp.le.s32.totalorder 1, %s15
      %p200 = scmp.lt.s32.totalorder %s15, 3
      %p201 = pnand %p199, %p200
      %p202 = pneg %p201
      // Predicated region
      $region29: #{tpu_custom_call.1} parent=5 // pred_check
        _
      $region30: #{tpu_custom_call.1} parent=5 // pred_check_branch
        %204 = sbr.rel (%p201) target = $region32
      $region31: #{tpu_custom_call.1} parent=5 // pred_region
        %s205 = ssub.s32 %s15, 1
        %s206 = sand.u32 %s49, 1
        %s207 = scalar_lea.sflag [#allocation3], %s206
        %s208 = sand.u32 %s49, 1
        %s209 = smul.addr %s208, 16
        %s210 = scalar_lea.vmem [#allocation2], %s209
        // Predicated region
        $region33: #{tpu_custom_call.1} parent=31 // pred_check
          %p211 = pneg %p62
        $region34: #{tpu_custom_call.1} parent=31 // pred_check_branch
          %213 = sbr.rel (%p211) target = $region36
        $region35: #{tpu_custom_call.1} parent=31 // pred_region
          %214 = dma.done %s207, 256
        $region36: #{tpu_custom_call.1} parent=31 // pred_fallthru
          _
        %s215 = sand.u32 %s49, 1
        %s216 = scalar_lea.sflag [#allocation3], %s215
        %s217 = sand.u32 %s49, 1
        %s218 = smul.addr %s217, 16
        %s219 = scalar_lea.vmem [#allocation2], %s218
        %p220 = pneg %p62
        %p221 = pneg %p59
        %p222 = scmp.lt.s32.totalorder %s27, 0
        %s223 = scalar_select %p222, %s27, 0
        %s224 = smul.addr %s223, 8
        %s225 = scalar_lea.vmem %s1, %s224
        %p226 = pneg %p88
        %p227 = pneg %p85
        %p228 = scmp.lt.s32.totalorder %s27, 0
        %s229 = scalar_select %p228, %s27, 0
        %s230 = smul.addr %s229, 8
        %s231 = scalar_lea.vmem %s2, %s230
        %p232 = pneg %p114
        %p233 = pneg %p111
        %p234 = pneg %p144
        %p235 = pneg %p141
        %s236 = sand.u32 %s131, 1
        %s237 = scalar_lea.sflag [#allocation4], %s236
        %s238 = sand.u32 %s131, 1
        %s239 = smul.addr %s238, 8
        %s240 = scalar_lea.vmem [#allocation5], %s239
        %p241 = scmp.lt.s32.totalorder %s27, 0
        %s242 = scalar_select %p241, %s27, 0
        %s243 = smul.addr %s242, 8
        %s244 = scalar_lea.vmem %s1, %s243
        %p245 = scmp.lt.s32.totalorder %s27, 0
        %s246 = scalar_select %p245, %s27, 0
        %s247 = smul.addr %s246, 8
        %s248 = scalar_lea.vmem %s2, %s247
        %v249 = vld [vmem:[%s244] sm:$0xff]
        %v250 = vld [vmem:[%s210] sm:$0xf]
        %vm251 = vcmask 31744
        %v253 = vsel %vm251, %v249, 0
        %vm255 = vcmask 1043456
        %v257 = vsel %vm255, %v250, 0
        %259 = vmatprep.subr.mxu0 0.0
        %260 = vmatpush1.msra.mxu0 %v257
        %261 = vmatprep.subr.mxu0 0.0
        %262 = vmatpush1.msra.mxu0 0.0
        %263 = vmatprep.subr.mxu0 0.0
        %264 = vmatpush1.msra.mxu0 0.0
        %265 = vmatprep.subr.mxu0 0.0
        %266 = vmatpush1.msra.mxu0 0.0
        %267 = vmatprep.subr.mxu0 0.0
        %268 = vmatpush1.msra.mxu0 0.0
        %269 = vmatprep.subr.mxu0 0.0
        %270 = vmatpush1.msra.mxu0 0.0
        %271 = vmatprep.subr.mxu0 0.0
        %272 = vmatpush1.msra.mxu0 0.0
        %273 = vmatprep.subr.mxu0 0.0
        %274 = vmatpush1.msra.mxu0 0.0
        %275 = vmatprep.subr.mxu0 0.0
        %276 = vmatpush1.msra.mxu0 0.0
        %277 = vmatprep.subr.mxu0 0.0
        %278 = vmatpush1.msra.mxu0 0.0
        %279 = vmatprep.subr.mxu0 0.0
        %280 = vmatpush1.msra.mxu0 0.0
        %281 = vmatprep.subr.mxu0 0.0
        %282 = vmatpush1.msra.mxu0 0.0
        %283 = vmatprep.subr.mxu0 0.0
        %284 = vmatpush1.msra.mxu0 0.0
        %285 = vmatprep.subr.mxu0 0.0
        %286 = vmatpush1.msra.mxu0 0.0
        %287 = vmatprep.subr.mxu0 0.0
        %288 = vmatpush1.msra.mxu0 0.0
        %289 = vmatprep.subr.mxu0 0.0
        %290 = vmatpush1.msra.mxu0 0.0
        %291 = vmatprep.subr.mxu0 0.0
        %292 = vmatpush1.msra.mxu0 0.0
        %293 = vmatprep.subr.mxu0 0.0
        %294 = vmatpush1.msra.mxu0 0.0
        %295 = vmatprep.subr.mxu0 0.0
        %296 = vmatpush1.msra.mxu0 0.0
        %297 = vmatprep.subr.mxu0 0.0
        %298 = vmatpush1.msra.mxu0 0.0
        %299 = vmatprep.subr.mxu0 0.0
        %300 = vmatpush1.msra.mxu0 0.0
        %301 = vmatprep.subr.mxu0 0.0
        %302 = vmatpush1.msra.mxu0 0.0
        %303 = vmatprep.subr.mxu0 0.0
        %304 = vmatpush1.msra.mxu0 0.0
        %305 = vmatprep.subr.mxu0 0.0
        %306 = vmatpush1.msra.mxu0 0.0
        %307 = vmatprep.subr.mxu0 0.0
        %308 = vmatpush1.msra.mxu0 0.0
        %309 = vmatprep.subr.mxu0 0.0
        %310 = vmatpush1.msra.mxu0 0.0
        %311 = vmatprep.subr.mxu0 0.0
        %312 = vmatpush1.msra.mxu0 0.0
        %313 = vmatprep.subr.mxu0 0.0
        %314 = vmatpush1.msra.mxu0 0.0
        %315 = vmatprep.subr.mxu0 0.0
        %316 = vmatpush1.msra.mxu0 0.0
        %317 = vmatprep.subr.mxu0 0.0
        %318 = vmatpush1.msra.mxu0 0.0
        %319 = vmatprep.subr.mxu0 0.0
        %320 = vmatpush1.msra.mxu0 0.0
        %321 = vmatprep.subr.mxu0 0.0
        %322 = vmatpush1.msra.mxu0 0.0
        %323 = vmatprep.mubr.f32.mxu0 0.0
        %324 = vmatmul.mubr.f32.gmra.mrb[0].mxu0 %v253
        %v325 = vpop.f32.mrb[0].mxu0
        %v326 = vadd.f32 0.0, %v325
        %v327 = vpop.f32.mrb[0].mxu0
        %328 = vdwg.mxu0
        %s329 = scalar_lea.vmem %s210, 4 [#allocation2]
        %v330 = vld [vmem:[%s329] sm:$0xf]
        %v332 = vsel %vm255, %v330, 0
        %334 = vmatprep.subr.mxu0 0.0
        %335 = vmatpush1.msra.mxu0 %v332
        %336 = vmatprep.subr.mxu0 0.0
        %337 = vmatpush1.msra.mxu0 0.0
        %338 = vmatprep.subr.mxu0 0.0
        %339 = vmatpush1.msra.mxu0 0.0
        %340 = vmatprep.subr.mxu0 0.0
        %341 = vmatpush1.msra.mxu0 0.0
        %342 = vmatprep.subr.mxu0 0.0
        %343 = vmatpush1.msra.mxu0 0.0
        %344 = vmatprep.subr.mxu0 0.0
        %345 = vmatpush1.msra.mxu0 0.0
        %346 = vmatprep.subr.mxu0 0.0
        %347 = vmatpush1.msra.mxu0 0.0
        %348 = vmatprep.subr.mxu0 0.0
        %349 = vmatpush1.msra.mxu0 0.0
        %350 = vmatprep.subr.mxu0 0.0
        %351 = vmatpush1.msra.mxu0 0.0
        %352 = vmatprep.subr.mxu0 0.0
        %353 = vmatpush1.msra.mxu0 0.0
        %354 = vmatprep.subr.mxu0 0.0
        %355 = vmatpush1.msra.mxu0 0.0
        %356 = vmatprep.subr.mxu0 0.0
        %357 = vmatpush1.msra.mxu0 0.0
        %358 = vmatprep.subr.mxu0 0.0
        %359 = vmatpush1.msra.mxu0 0.0
        %360 = vmatprep.subr.mxu0 0.0
        %361 = vmatpush1.msra.mxu0 0.0
        %362 = vmatprep.subr.mxu0 0.0
        %363 = vmatpush1.msra.mxu0 0.0
        %364 = vmatprep.subr.mxu0 0.0
        %365 = vmatpush1.msra.mxu0 0.0
        %366 = vmatprep.subr.mxu0 0.0
        %367 = vmatpush1.msra.mxu0 0.0
        %368 = vmatprep.subr.mxu0 0.0
        %369 = vmatpush1.msra.mxu0 0.0
        %370 = vmatprep.subr.mxu0 0.0
        %371 = vmatpush1.msra.mxu0 0.0
        %372 = vmatprep.subr.mxu0 0.0
        %373 = vmatpush1.msra.mxu0 0.0
        %374 = vmatprep.subr.mxu0 0.0
        %375 = vmatpush1.msra.mxu0 0.0
        %376 = vmatprep.subr.mxu0 0.0
        %377 = vmatpush1.msra.mxu0 0.0
        %378 = vmatprep.subr.mxu0 0.0
        %379 = vmatpush1.msra.mxu0 0.0
        %380 = vmatprep.subr.mxu0 0.0
        %381 = vmatpush1.msra.mxu0 0.0
        %382 = vmatprep.subr.mxu0 0.0
        %383 = vmatpush1.msra.mxu0 0.0
        %384 = vmatprep.subr.mxu0 0.0
        %385 = vmatpush1.msra.mxu0 0.0
        %386 = vmatprep.subr.mxu0 0.0
        %387 = vmatpush1.msra.mxu0 0.0
        %388 = vmatprep.subr.mxu0 0.0
        %389 = vmatpush1.msra.mxu0 0.0
        %390 = vmatprep.subr.mxu0 0.0
        %391 = vmatpush1.msra.mxu0 0.0
        %392 = vmatprep.subr.mxu0 0.0
        %393 = vmatpush1.msra.mxu0 0.0
        %394 = vmatprep.subr.mxu0 0.0
        %395 = vmatpush1.msra.mxu0 0.0
        %396 = vmatprep.subr.mxu0 0.0
        %397 = vmatpush1.msra.mxu0 0.0
        %398 = vmatprep.mubr.f32.mxu0 0.0
        %399 = vmatmul.mubr.f32.gmra.mrb[0].mxu0 %v253
        %v400 = vpop.f32.mrb[0].mxu0
        %v401 = vadd.f32 0.0, %v400
        %v402 = vpop.f32.mrb[0].mxu0
        %403 = vdwg.mxu0
        %s404 = scalar_lea.vmem %s210, 8 [#allocation2]
        %v405 = vld [vmem:[%s404] sm:$0xf]
        %v407 = vsel %vm255, %v405, 0
        %409 = vmatprep.subr.mxu0 0.0
        %410 = vmatpush1.msra.mxu0 %v407
        %411 = vmatprep.subr.mxu0 0.0
        %412 = vmatpush1.msra.mxu0 0.0
        %413 = vmatprep.subr.mxu0 0.0
        %414 = vmatpush1.msra.mxu0 0.0
        %415 = vmatprep.subr.mxu0 0.0
        %416 = vmatpush1.msra.mxu0 0.0
        %417 = vmatprep.subr.mxu0 0.0
        %418 = vmatpush1.msra.mxu0 0.0
        %419 = vmatprep.subr.mxu0 0.0
        %420 = vmatpush1.msra.mxu0 0.0
        %421 = vmatprep.subr.mxu0 0.0
        %422 = vmatpush1.msra.mxu0 0.0
        %423 = vmatprep.subr.mxu0 0.0
        %424 = vmatpush1.msra.mxu0 0.0
        %425 = vmatprep.subr.mxu0 0.0
        %426 = vmatpush1.msra.mxu0 0.0
        %427 = vmatprep.subr.mxu0 0.0
        %428 = vmatpush1.msra.mxu0 0.0
        %429 = vmatprep.subr.mxu0 0.0
        %430 = vmatpush1.msra.mxu0 0.0
        %431 = vmatprep.subr.mxu0 0.0
        %432 = vmatpush1.msra.mxu0 0.0
        %433 = vmatprep.subr.mxu0 0.0
        %434 = vmatpush1.msra.mxu0 0.0
        %435 = vmatprep.subr.mxu0 0.0
        %436 = vmatpush1.msra.mxu0 0.0
        %437 = vmatprep.subr.mxu0 0.0
        %438 = vmatpush1.msra.mxu0 0.0
        %439 = vmatprep.subr.mxu0 0.0
        %440 = vmatpush1.msra.mxu0 0.0
        %441 = vmatprep.subr.mxu0 0.0
        %442 = vmatpush1.msra.mxu0 0.0
        %443 = vmatprep.subr.mxu0 0.0
        %444 = vmatpush1.msra.mxu0 0.0
        %445 = vmatprep.subr.mxu0 0.0
        %446 = vmatpush1.msra.mxu0 0.0
        %447 = vmatprep.subr.mxu0 0.0
        %448 = vmatpush1.msra.mxu0 0.0
        %449 = vmatprep.subr.mxu0 0.0
        %450 = vmatpush1.msra.mxu0 0.0
        %451 = vmatprep.subr.mxu0 0.0
        %452 = vmatpush1.msra.mxu0 0.0
        %453 = vmatprep.subr.mxu0 0.0
        %454 = vmatpush1.msra.mxu0 0.0
        %455 = vmatprep.subr.mxu0 0.0
        %456 = vmatpush1.msra.mxu0 0.0
        %457 = vmatprep.subr.mxu0 0.0
        %458 = vmatpush1.msra.mxu0 0.0
        %459 = vmatprep.subr.mxu0 0.0
        %460 = vmatpush1.msra.mxu0 0.0
        %461 = vmatprep.subr.mxu0 0.0
        %462 = vmatpush1.msra.mxu0 0.0
        %463 = vmatprep.subr.mxu0 0.0
        %464 = vmatpush1.msra.mxu0 0.0
        %465 = vmatprep.subr.mxu0 0.0
        %466 = vmatpush1.msra.mxu0 0.0
        %467 = vmatprep.subr.mxu0 0.0
        %468 = vmatpush1.msra.mxu0 0.0
        %469 = vmatprep.subr.mxu0 0.0
        %470 = vmatpush1.msra.mxu0 0.0
        %471 = vmatprep.subr.mxu0 0.0
        %472 = vmatpush1.msra.mxu0 0.0
        %473 = vmatprep.mubr.f32.mxu0 0.0
        %474 = vmatmul.mubr.f32.gmra.mrb[0].mxu0 %v253
        %v475 = vpop.f32.mrb[0].mxu0
        %v476 = vadd.f32 0.0, %v475
        %v477 = vpop.f32.mrb[0].mxu0
        %478 = vdwg.mxu0
        %s479 = scalar_lea.vmem %s210, 12 [#allocation2]
        %v480 = vld [vmem:[%s479] sm:$0xf]
        %v482 = vsel %vm255, %v480, 0
        %484 = vmatprep.subr.mxu0 0.0
        %485 = vmatpush1.msra.mxu0 %v482
        %486 = vmatprep.subr.mxu0 0.0
        %487 = vmatpush1.msra.mxu0 0.0
        %488 = vmatprep.subr.mxu0 0.0
        %489 = vmatpush1.msra.mxu0 0.0
        %490 = vmatprep.subr.mxu0 0.0
        %491 = vmatpush1.msra.mxu0 0.0
        %492 = vmatprep.subr.mxu0 0.0
        %493 = vmatpush1.msra.mxu0 0.0
        %494 = vmatprep.subr.mxu0 0.0
        %495 = vmatpush1.msra.mxu0 0.0
        %496 = vmatprep.subr.mxu0 0.0
        %497 = vmatpush1.msra.mxu0 0.0
        %498 = vmatprep.subr.mxu0 0.0
        %499 = vmatpush1.msra.mxu0 0.0
        %500 = vmatprep.subr.mxu0 0.0
        %501 = vmatpush1.msra.mxu0 0.0
        %502 = vmatprep.subr.mxu0 0.0
        %503 = vmatpush1.msra.mxu0 0.0
        %504 = vmatprep.subr.mxu0 0.0
        %505 = vmatpush1.msra.mxu0 0.0
        %506 = vmatprep.subr.mxu0 0.0
        %507 = vmatpush1.msra.mxu0 0.0
        %508 = vmatprep.subr.mxu0 0.0
        %509 = vmatpush1.msra.mxu0 0.0
        %510 = vmatprep.subr.mxu0 0.0
        %511 = vmatpush1.msra.mxu0 0.0
        %512 = vmatprep.subr.mxu0 0.0
        %513 = vmatpush1.msra.mxu0 0.0
        %514 = vmatprep.subr.mxu0 0.0
        %515 = vmatpush1.msra.mxu0 0.0
        %516 = vmatprep.subr.mxu0 0.0
        %517 = vmatpush1.msra.mxu0 0.0
        %518 = vmatprep.subr.mxu0 0.0
        %519 = vmatpush1.msra.mxu0 0.0
        %520 = vmatprep.subr.mxu0 0.0
        %521 = vmatpush1.msra.mxu0 0.0
        %522 = vmatprep.subr.mxu0 0.0
        %523 = vmatpush1.msra.mxu0 0.0
        %524 = vmatprep.subr.mxu0 0.0
        %525 = vmatpush1.msra.mxu0 0.0
        %526 = vmatprep.subr.mxu0 0.0
        %527 = vmatpush1.msra.mxu0 0.0
        %528 = vmatprep.subr.mxu0 0.0
        %529 = vmatpush1.msra.mxu0 0.0
        %530 = vmatprep.subr.mxu0 0.0
        %531 = vmatpush1.msra.mxu0 0.0
        %532 = vmatprep.subr.mxu0 0.0
        %533 = vmatpush1.msra.mxu0 0.0
        %534 = vmatprep.subr.mxu0 0.0
        %535 = vmatpush1.msra.mxu0 0.0
        %536 = vmatprep.subr.mxu0 0.0
        %537 = vmatpush1.msra.mxu0 0.0
        %538 = vmatprep.subr.mxu0 0.0
        %539 = vmatpush1.msra.mxu0 0.0
        %540 = vmatprep.subr.mxu0 0.0
        %541 = vmatpush1.msra.mxu0 0.0
        %542 = vmatprep.subr.mxu0 0.0
        %543 = vmatpush1.msra.mxu0 0.0
        %544 = vmatprep.subr.mxu0 0.0
        %545 = vmatpush1.msra.mxu0 0.0
        %546 = vmatprep.subr.mxu0 0.0
        %547 = vmatpush1.msra.mxu0 0.0
        %548 = vmatprep.mubr.f32.mxu0 0.0
        %549 = vmatmul.mubr.f32.gmra.mrb[0].mxu0 %v253
        %v550 = vpop.f32.mrb[0].mxu0
        %v551 = vadd.f32 0.0, %v550
        %v552 = vpop.f32.mrb[0].mxu0
        %553 = vdwg.mxu0
        %v554 = vmax.f32 %v326, %v401
        %v555 = vmax.f32 %v476, %v551
        %v556 = vmax.f32 %v554, %v555
        %v557 = vld [vmem:[%s248] sm:$0xff]
        %559 = vset.pattern.permute.xlu0 0
        %560 = vperm.xlu0 %559, %v557
        %v561 = vpop.permute.xlu0 %560
        %v563 = vadd.f32 %v556, %v561
        %v564 = vmax.f32 %v563, 0.0
        %vm565 = vcmask 523264
        %566 = vst.msk [vmem:[%s240] sm:$0xff] %vm565, %v564
        %s567 = sand.u32 %s131, 1
        %s568 = scalar_lea.sflag [#allocation4], %s567
        %s569 = sand.u32 %s131, 1
        %s570 = smul.addr %s569, 8
        %s571 = scalar_lea.vmem [#allocation5], %s570
        // Predicated region
        $region37: #{tpu_custom_call.1} parent=31 // pred_check
          %p572 = pneg %p141
        $region38: #{tpu_custom_call.1} parent=31 // pred_check_branch
          %574 = sbr.rel (%p572) target = $region40
        $region39: #{tpu_custom_call.1} parent=31 // pred_region
          %s576 = ssub.s32 128, 128
          %577 = vsyncadd %s568, %s576
          %s578 = sadd.s32 %s26, %s27
          %s579 = sadd.s32 %s578, %s25
          %s580 = smul.addr %s579, 128
          %s581 = scalar_lea.hbm %s3, %s580
          %s583 = sshll.u32 %s571, 4
          %s584 = int_to_ptr.vmem [resolvable:$true] %s583
          %586 = dma.vmem_to_hbm [thread:$0]  %s584, 128, %s581, %s568
        $region40: #{tpu_custom_call.1} parent=31 // pred_fallthru
          _
      $region32: #{tpu_custom_call.1} parent=5 // pred_fallthru
        _
      %p587 = scmp.le.s32.totalorder 2, %s15
      // Predicated region
      $region41: #{tpu_custom_call.1} parent=5 // pred_check
        %p588 = pneg %p587
      $region42: #{tpu_custom_call.1} parent=5 // pred_check_branch
        %590 = sbr.rel (%p588) target = $region44
      $region43: #{tpu_custom_call.1} parent=5 // pred_region
        %s591 = ssub.s32 %s15, 2
        // Predicated region
        $region45: #{tpu_custom_call.1} parent=43 // pred_check
          %p592 = pneg %p147
        $region46: #{tpu_custom_call.1} parent=43 // pred_check_branch
          %594 = sbr.rel (%p592) target = $region48
        $region47: #{tpu_custom_call.1} parent=43 // pred_region
          %s595 = sand.u32 %s132, 1
          %s596 = scalar_lea.sflag [#allocation4], %s595
          %s597 = sand.u32 %s132, 1
          %s598 = smul.addr %s597, 8
          %s599 = scalar_lea.vmem [#allocation5], %s598
          %600 = dma.done %s596, 128
        $region48: #{tpu_custom_call.1} parent=43 // pred_fallthru
          _
      $region44: #{tpu_custom_call.1} parent=5 // pred_fallthru
        _
    $region6: #{tpu_custom_call.1} parent=1 // loop_footer
      %s19 = sadd.s32 1, %s15
    $region7: #{tpu_custom_call.1} parent=1 // loop_footer_branch
      %14 = sbr.rel target = $region3
    $region8: #{tpu_custom_call.1} parent=1 // loop_exit
      _
    %601 = vsyncpa [#allocation3], 1
    %s602 = scalar_lea.sflag [#allocation3], 1
    %603 = vsyncpa %s602, 1
    %604 = vsyncpa [#allocation4], 1
    %s605 = scalar_lea.sflag [#allocation4], 1
    %606 = vsyncpa %s605, 1

</llo_original>
